<compile_context>
chip_gen: v7x
topology: tpu7x:2x2x1
jax: 0.10.0
libtpu: 0.0.40
codegen_flags: <defaults>
</compile_context>

<pallas_src>
import functools

import jax
import jax.numpy as jnp
from jax.experimental import pallas as pl
from jax.experimental.pallas import tpu as pltpu

_LANE = 128  # TPU lane width


def _round_up(n, m):
    return (n + m - 1) // m * m


def _fc_kernel(x_ref, w1_ref, b1_ref, w2_ref, b2_ref, out_ref):
    # x:  (TB, F)   bf16
    # w1: (F, Hp)   bf16      b1: (1, Hp)  f32
    # w2: (Hp, Cp)  bf16      b2: (1, Cp)  f32
    # out:(TB, Cp)  f32
    h = jnp.dot(x_ref[...], w1_ref[...], preferred_element_type=jnp.float32)
    h = jnp.maximum(h + b1_ref[...], 0.0)            # bias + ReLU in f32 (VPU)
    o = jnp.dot(h.astype(w2_ref.dtype), w2_ref[...],
                preferred_element_type=jnp.float32)
    out_ref[...] = (o + b2_ref[...]).astype(out_ref.dtype)


@functools.partial(jax.jit, static_argnames=("batch_tile",))
def fc_forward(x, w1, b1, w2, b2, *, batch_tile=1024):
    """Fused relu(x @ w1 + b1) @ w2 + b2.

    x:  (B, F) float32
    w1: (F, H) float32, b1: (H,) or (1, H) float32
    w2: (H, C) float32, b2: (C,) or (1, C) float32
    Returns (B, C) float32.
    """
    B, F = x.shape
    H = w1.shape[1]
    C = w2.shape[1]
    Hp = _round_up(H, _LANE)
    Cp = _round_up(C, _LANE)

    # Zero-pad hidden/class dims to the lane width (mathematically exact) and
    # cast matmul operands to bf16 for full MXU throughput; accumulate in f32.
    w1p = jnp.zeros((F, Hp), jnp.bfloat16).at[:, :H].set(w1.astype(jnp.bfloat16))
    b1p = jnp.zeros((1, Hp), jnp.float32).at[:, :H].set(b1.reshape(1, H))
    w2p = jnp.zeros((Hp, Cp), jnp.bfloat16).at[:H, :C].set(w2.astype(jnp.bfloat16))
    b2p = jnp.zeros((1, Cp), jnp.float32).at[:, :C].set(b2.reshape(1, C))
    xb = x.astype(jnp.bfloat16)

    flops = 2 * B * (F * Hp + Hp * Cp)
    bytes_accessed = (xb.size * 2 + w1p.size * 2 + w2p.size * 2
                      + b1p.size * 4 + b2p.size * 4 + B * Cp * 4)
    cost = pl.CostEstimate(flops=flops, transcendentals=0,
                           bytes_accessed=bytes_accessed)

    if B <= batch_tile:
        # Small batch: no grid at all -> no pipeline prologue/epilogue, all
        # operands resident in VMEM for one shot.
        vmem = pltpu.MemorySpace.VMEM
        out_p = pl.pallas_call(
            _fc_kernel,
            out_shape=jax.ShapeDtypeStruct((B, Cp), jnp.float32),
            in_specs=[pl.BlockSpec(memory_space=vmem)] * 5,
            out_specs=pl.BlockSpec(memory_space=vmem),
            cost_estimate=cost,
        )(xb, w1p, b1p, w2p, b2p)
        return out_p[:, :C]

    # Large batch: tile B; weights/biases use a grid-index-independent
    # index_map so they are DMA'd once and stay VMEM-resident.
    TB = batch_tile
    nb = pl.cdiv(B, TB)
    Bp = nb * TB
    if Bp != B:
        xb = jnp.zeros((Bp, F), jnp.bfloat16).at[:B].set(xb)

    grid_spec = pl.GridSpec(
        grid=(nb,),
        in_specs=[
            pl.BlockSpec((TB, F), lambda i: (i, 0)),
            pl.BlockSpec((F, Hp), lambda i: (0, 0)),
            pl.BlockSpec((1, Hp), lambda i: (0, 0)),
            pl.BlockSpec((Hp, Cp), lambda i: (0, 0)),
            pl.BlockSpec((1, Cp), lambda i: (0, 0)),
        ],
        out_specs=pl.BlockSpec((TB, Cp), lambda i: (i, 0)),
    )
    out_p = pl.pallas_call(
        _fc_kernel,
        out_shape=jax.ShapeDtypeStruct((Bp, Cp), jnp.float32),
        grid_spec=grid_spec,
        compiler_params=pltpu.CompilerParams(
            dimension_semantics=("parallel",)),
        cost_estimate=cost,
    )(xb, w1p, b1p, w2p, b2p)
    return out_p[:B, :C]


def init_fc_params(key, num_features, num_classes, hidden=100):
    """Deterministic PyTorch-Linear-style init (uniform +/- 1/sqrt(fan_in))."""
    k1, k2, k3, k4 = jax.random.split(key, 4)
    lim1 = 1.0 / jnp.sqrt(num_features)
    lim2 = 1.0 / jnp.sqrt(hidden)
    w1 = jax.random.uniform(k1, (num_features, hidden), jnp.float32, -lim1, lim1)
    b1 = jax.random.uniform(k2, (hidden,), jnp.float32, -lim1, lim1)
    w2 = jax.random.uniform(k3, (hidden, num_classes), jnp.float32, -lim2, lim2)
    b2 = jax.random.uniform(k4, (num_classes,), jnp.float32, -lim2, lim2)
    return w1, b1, w2, b2


if __name__ == "__main__":
    num_features = 32
    num_classes = 10

    key = jax.random.PRNGKey(0)
    kx, kp, kx2 = jax.random.split(key, 3)
    w1, b1, w2, b2 = init_fc_params(kp, num_features, num_classes)

    # --- small batch: grid-less path -------------------------------------
    batch = 8
    x = jax.random.normal(kx, (batch, num_features), jnp.float32)
    out = jax.block_until_ready(fc_forward(x, w1, b1, w2, b2))
    ref = jnp.maximum(x @ w1 + b1[None, :], 0.0) @ w2 + b2[None, :]
    assert out.shape == (batch, num_classes)
    # bf16 MXU inputs with f32 accumulation -> loosened tolerance.
    assert jnp.allclose(out, ref, atol=2e-2, rtol=2e-2)

    # --- large batch: batch-tiled (parallel grid) path --------------------
    big_batch = 4096
    x2 = jax.random.normal(kx2, (big_batch, num_features), jnp.float32)
    out2 = jax.block_until_ready(
        fc_forward(x2, w1, b1, w2, b2, batch_tile=1024))
    ref2 = jnp.maximum(x2 @ w1 + b1[None, :], 0.0) @ w2 + b2[None, :]
    assert out2.shape == (big_batch, num_classes)
    assert jnp.allclose(out2, ref2, atol=2e-2, rtol=2e-2)

    print("KERNEL_OK")
</pallas_src>

<mosaic_0001>
module attributes {stable_mosaic.version = 11 : i64} {
  func.func @_fc_kernel(%arg0: memref<8x32xbf16, #tpu.memory_space<vmem>>, %arg1: memref<32x128xbf16, #tpu.memory_space<vmem>>, %arg2: memref<1x128xf32, #tpu.memory_space<vmem>>, %arg3: memref<128x128xbf16, #tpu.memory_space<vmem>>, %arg4: memref<1x128xf32, #tpu.memory_space<vmem>>, %arg5: memref<8x128xf32, #tpu.memory_space<vmem>>) attributes {dimension_semantics = [], scalar_prefetch = 0 : i64, scratch_operands = 0 : i64, tpu.core_type = #tpu.core_type<tc>} {
    %c0 = arith.constant 0 : index
    %c0_0 = arith.constant 0 : index
    %0 = vector.load %arg0[%c0, %c0_0] : memref<8x32xbf16, #tpu.memory_space<vmem>>, vector<8x32xbf16>
    %c0_1 = arith.constant 0 : index
    %c0_2 = arith.constant 0 : index
    %1 = vector.load %arg1[%c0_1, %c0_2] : memref<32x128xbf16, #tpu.memory_space<vmem>>, vector<32x128xbf16>
    %cst = arith.constant dense<0.000000e+00> : vector<8x128xf32>
    %2 = tpu.matmul %0, %1, %cst {dimension_numbers = #tpu.dot_dimension_numbers<[1], [0], [0], [1], [0, 0, 1, 1], [], []>} : vector<8x32xbf16>, vector<32x128xbf16>, vector<8x128xf32> -> vector<8x128xf32>
    %c0_3 = arith.constant 0 : index
    %c0_4 = arith.constant 0 : index
    %3 = vector.load %arg2[%c0_3, %c0_4] : memref<1x128xf32, #tpu.memory_space<vmem>>, vector<1x128xf32>
    %4 = vector.broadcast %3 : vector<1x128xf32> to vector<8x128xf32>
    %5 = arith.addf %2, %4 : vector<8x128xf32>
    %cst_5 = arith.constant 0.000000e+00 : f32
    %6 = vector.broadcast %cst_5 : f32 to vector<8x128xf32>
    %7 = arith.maximumf %5, %6 : vector<8x128xf32>
    %8 = arith.truncf %7 : vector<8x128xf32> to vector<8x128xbf16>
    %c0_6 = arith.constant 0 : index
    %c0_7 = arith.constant 0 : index
    %9 = vector.load %arg3[%c0_6, %c0_7] : memref<128x128xbf16, #tpu.memory_space<vmem>>, vector<128x128xbf16>
    %cst_8 = arith.constant dense<0.000000e+00> : vector<8x128xf32>
    %10 = tpu.matmul %8, %9, %cst_8 {dimension_numbers = #tpu.dot_dimension_numbers<[1], [0], [0], [1], [0, 0, 1, 1], [], []>} : vector<8x128xbf16>, vector<128x128xbf16>, vector<8x128xf32> -> vector<8x128xf32>
    %c0_9 = arith.constant 0 : index
    %c0_10 = arith.constant 0 : index
    %11 = vector.load %arg4[%c0_9, %c0_10] : memref<1x128xf32, #tpu.memory_space<vmem>>, vector<1x128xf32>
    %12 = vector.broadcast %11 : vector<1x128xf32> to vector<8x128xf32>
    %13 = arith.addf %10, %12 : vector<8x128xf32>
    %c0_11 = arith.constant 0 : index
    %c0_12 = arith.constant 0 : index
    %14 = vector.load %arg5[%c0_11, %c0_12] : memref<8x128xf32, #tpu.memory_space<vmem>>, vector<8x128xf32>
    tpu.vector_store %arg5[%c0_11, %c0_12], %13 {strides = array<i32>} : memref<8x128xf32, #tpu.memory_space<vmem>>, vector<8x128xf32>,
    return
  }
}

</mosaic_0001>

<llo_original>
// kernel: fc_forward.1
$region0: #{fc_forward.1}
  #allocation0 [shape = 'u32[]', space=smem, size = 0x4, offset = 0x4, fixed_abs, tag = 'smem constant byte address 0x4 - core index']
  #allocation1 [shape = 'u32[144,128]{1,0:T(1,128)}', space=vmem, size = 0x12000, scoped, tag = 'internal scratch']
  %s0 = inlined_call_operand.vmem [shape: bf16[8,32], index: 0, kind: input, shape index: {}]
  %s1 = inlined_call_operand.vmem [shape: bf16[32,128], index: 1, kind: input, shape index: {}]
  %s2 = inlined_call_operand.vmem [shape: f32[1,128], index: 2, kind: input, shape index: {}]
  %s3 = inlined_call_operand.vmem [shape: bf16[128,128], index: 3, kind: input, shape index: {}]
  %s4 = inlined_call_operand.vmem [shape: f32[1,128], index: 4, kind: input, shape index: {}]
  %s5 = inlined_call_operand.hbm [shape: f32[8,128], index: 5, kind: output, shape index: {}]
  %s6 = sld [smem:[#allocation0]]
  $region30: #{fc_forward.1} parent=0
    _
  %s8 = ssub.s32 1, %s6
  %s9 = scalar_select 0, %s8, %s6
  $region1: #{fc_forward.1} parent=0
    #allocation2 [shape = 'u8[4096]{0}', space=vmem, size = 0x1000, scoped, tag = 'output window, operand 0, single buffered']
    #allocation3 [shape = 's32[1]{0}', space=sflag, size = 0x4, scoped, tag = 'scoped memory for fc_forward.1']
    %10 = vsyncpa [#allocation3], 0
    // Predicated region
    $region2: #{fc_forward.1} parent=1 // pred_check
      _
    $region3: #{fc_forward.1} parent=1 // pred_check_branch
      %12 = sbr.rel (0) target = $region5
    $region4: #{fc_forward.1} parent=1 // pred_region
      _
    $region5: #{fc_forward.1} parent=1 // pred_fallthru
      _
    // Predicated region
    $region6: #{fc_forward.1} parent=1 // pred_check
      _
    $region7: #{fc_forward.1} parent=1 // pred_check_branch
      %14 = sbr.rel (0) target = $region9
    $region8: #{fc_forward.1} parent=1 // pred_region
      _
    $region9: #{fc_forward.1} parent=1 // pred_fallthru
      _
    // Predicated region
    $region10: #{fc_forward.1} parent=1 // pred_check
      _
    $region11: #{fc_forward.1} parent=1 // pred_check_branch
      %16 = sbr.rel (0) target = $region13
    $region12: #{fc_forward.1} parent=1 // pred_region
      _
    $region13: #{fc_forward.1} parent=1 // pred_fallthru
      _
    // Predicated region
    $region14: #{fc_forward.1} parent=1 // pred_check
      _
    $region15: #{fc_forward.1} parent=1 // pred_check_branch
      %18 = sbr.rel (0) target = $region17
    $region16: #{fc_forward.1} parent=1 // pred_region
      _
    $region17: #{fc_forward.1} parent=1 // pred_fallthru
      _
    // Predicated region
    $region18: #{fc_forward.1} parent=1 // pred_check
      _
    $region19: #{fc_forward.1} parent=1 // pred_check_branch
      %20 = sbr.rel (0) target = $region21
    $region20: #{fc_forward.1} parent=1 // pred_region
      _
    $region21: #{fc_forward.1} parent=1 // pred_fallthru
      _
    %v22 = vld [vmem:[%s0] sm:$0xf]
    %v23 = vld [vmem:[%s1] sm:$0xf]
    %v24 = vld [vmem:[%s1 + $0x4] sm:$0xf]
    %v25 = vld [vmem:[%s1 + $0x8] sm:$0xf]
    %v26 = vld [vmem:[%s1 + $0xc] sm:$0xf]
    %v27 = vld [vmem:[%s2] sm:$0x1]
    %v29 = vlaneseq
    %v30 = vshrl.u32 %v29, 7
    %v31 = vsub.s32 0, %v30
    %v32 = vrot.slane %v27, %v31
    %v38 = vunpack.c.l.b16 %v23
    %v39 = vunpack.c.l.b16 %v24
    %v40 = vunpack.c.l.b16 %v25
    %v41 = vunpack.c.l.b16 %v26
    %v42 = vpack.c.b16 %v39, %v38
    %v43 = vpack.c.b16 %v41, %v40
    %vm46 = vcmask 261120
    %v48 = vsel %vm46, %v22, 0
    %50 = vmatprep.subr.bf16.mxu0 0
    %51 = vmatpush1.bf16.msra.mxu0 %v42
    %52 = vmatprep.subr.bf16.mxu0 0
    %53 = vmatpush1.bf16.msra.mxu0 %v43
    %54 = vmatprep.subr.bf16.mxu0 0
    %55 = vmatpush1.bf16.msra.mxu0 0
    %56 = vmatprep.subr.bf16.mxu0 0
    %57 = vmatpush1.bf16.msra.mxu0 0
    %58 = vmatprep.subr.bf16.mxu0 0
    %59 = vmatpush1.bf16.msra.mxu0 0
    %60 = vmatprep.subr.bf16.mxu0 0
    %61 = vmatpush1.bf16.msra.mxu0 0
    %62 = vmatprep.subr.bf16.mxu0 0
    %63 = vmatpush1.bf16.msra.mxu0 0
    %64 = vmatprep.subr.bf16.mxu0 0
    %65 = vmatpush1.bf16.msra.mxu0 0
    %66 = vmatprep.subr.bf16.mxu0 0
    %67 = vmatpush1.bf16.msra.mxu0 0
    %68 = vmatprep.subr.bf16.mxu0 0
    %69 = vmatpush1.bf16.msra.mxu0 0
    %70 = vmatprep.subr.bf16.mxu0 0
    %71 = vmatpush1.bf16.msra.mxu0 0
    %72 = vmatprep.subr.bf16.mxu0 0
    %73 = vmatpush1.bf16.msra.mxu0 0
    %74 = vmatprep.subr.bf16.mxu0 0
    %75 = vmatpush1.bf16.msra.mxu0 0
    %76 = vmatprep.subr.bf16.mxu0 0
    %77 = vmatpush1.bf16.msra.mxu0 0
    %78 = vmatprep.subr.bf16.mxu0 0
    %79 = vmatpush1.bf16.msra.mxu0 0
    %80 = vmatprep.subr.bf16.mxu0 0
    %81 = vmatpush1.bf16.msra.mxu0 0
    %82 = vmatprep.mubr.bf16.mxu0 0
    %83 = vmatmul.mubr.bf16.gmra.mrb[0].mxu0 %v48
    %v84 = vpop.f32.mrb[0].mxu0
    %v85 = vadd.f32 %v32, %v84
    %v86 = vpop.f32.mrb[0].mxu0
    %v87 = vpop.f32.mrb[0].mxu0
    %v88 = vpop.f32.mrb[0].mxu0
    %89 = vdwg.mxu0
    %v90 = vmax.f32 %v85, 0.0
    %v91 = vpack.c.bf16 %v90, %v90
    %v92 = vld [vmem:[%s3] sm:$0xf]
    %v93 = vld [vmem:[%s3 + $0x4] sm:$0xf]
    %v94 = vld [vmem:[%s3 + $0x8] sm:$0xf]
    %v95 = vld [vmem:[%s3 + $0xc] sm:$0xf]
    %v96 = vld [vmem:[%s3 + $0x10] sm:$0xf]
    %v97 = vld [vmem:[%s3 + $0x14] sm:$0xf]
    %v98 = vld [vmem:[%s3 + $0x18] sm:$0xf]
    %v99 = vld [vmem:[%s3 + $0x1c] sm:$0xf]
    %v100 = vld [vmem:[%s3 + $0x20] sm:$0xf]
    %v101 = vld [vmem:[%s3 + $0x24] sm:$0xf]
    %v102 = vld [vmem:[%s3 + $0x28] sm:$0xf]
    %v103 = vld [vmem:[%s3 + $0x2c] sm:$0xf]
    %v104 = vld [vmem:[%s3 + $0x30] sm:$0xf]
    %v105 = vld [vmem:[%s3 + $0x34] sm:$0xf]
    %v106 = vld [vmem:[%s3 + $0x38] sm:$0xf]
    %v107 = vld [vmem:[%s3 + $0x3c] sm:$0xf]
    %v108 = vld [vmem:[%s4] sm:$0x1]
    %v110 = vlaneseq
    %v111 = vshrl.u32 %v110, 7
    %v112 = vsub.s32 0, %v111
    %v113 = vrot.slane %v108, %v112
    %v131 = vunpack.c.l.b16 %v92
    %v132 = vunpack.c.l.b16 %v93
    %v133 = vunpack.c.l.b16 %v94
    %v134 = vunpack.c.l.b16 %v95
    %v135 = vunpack.c.l.b16 %v96
    %v136 = vunpack.c.l.b16 %v97
    %v137 = vunpack.c.l.b16 %v98
    %v138 = vunpack.c.l.b16 %v99
    %v139 = vunpack.c.l.b16 %v100
    %v140 = vunpack.c.l.b16 %v101
    %v141 = vunpack.c.l.b16 %v102
    %v142 = vunpack.c.l.b16 %v103
    %v143 = vunpack.c.l.b16 %v104
    %v144 = vunpack.c.l.b16 %v105
    %v145 = vunpack.c.l.b16 %v106
    %v146 = vunpack.c.l.b16 %v107
    %v147 = vpack.c.b16 %v132, %v131
    %v148 = vpack.c.b16 %v134, %v133
    %v149 = vpack.c.b16 %v136, %v135
    %v150 = vpack.c.b16 %v138, %v137
    %v151 = vpack.c.b16 %v140, %v139
    %v152 = vpack.c.b16 %v142, %v141
    %v153 = vpack.c.b16 %v144, %v143
    %v154 = vpack.c.b16 %v146, %v145
    %163 = vmatprep.subr.bf16.mxu0 0
    %164 = vmatpush1.bf16.msra.mxu0 %v147
    %165 = vmatprep.subr.bf16.mxu0 0
    %166 = vmatpush1.bf16.msra.mxu0 %v148
    %167 = vmatprep.subr.bf16.mxu0 0
    %168 = vmatpush1.bf16.msra.mxu0 %v149
    %169 = vmatprep.subr.bf16.mxu0 0
    %170 = vmatpush1.bf16.msra.mxu0 %v150
    %171 = vmatprep.subr.bf16.mxu0 0
    %172 = vmatpush1.bf16.msra.mxu0 %v151
    %173 = vmatprep.subr.bf16.mxu0 0
    %174 = vmatpush1.bf16.msra.mxu0 %v152
    %175 = vmatprep.subr.bf16.mxu0 0
    %176 = vmatpush1.bf16.msra.mxu0 %v153
    %177 = vmatprep.subr.bf16.mxu0 0
    %178 = vmatpush1.bf16.msra.mxu0 %v154
    %179 = vmatprep.subr.bf16.mxu0 0
    %180 = vmatpush1.bf16.msra.mxu0 0
    %181 = vmatprep.subr.bf16.mxu0 0
    %182 = vmatpush1.bf16.msra.mxu0 0
    %183 = vmatprep.subr.bf16.mxu0 0
    %184 = vmatpush1.bf16.msra.mxu0 0
    %185 = vmatprep.subr.bf16.mxu0 0
    %186 = vmatpush1.bf16.msra.mxu0 0
    %187 = vmatprep.subr.bf16.mxu0 0
    %188 = vmatpush1.bf16.msra.mxu0 0
    %189 = vmatprep.subr.bf16.mxu0 0
    %190 = vmatpush1.bf16.msra.mxu0 0
    %191 = vmatprep.subr.bf16.mxu0 0
    %192 = vmatpush1.bf16.msra.mxu0 0
    %193 = vmatprep.subr.bf16.mxu0 0
    %194 = vmatpush1.bf16.msra.mxu0 0
    %195 = vmatprep.mubr.bf16.mxu0 0
    %196 = vmatmul.mubr.bf16.gmra.mrb[0].mxu0 %v91
    %v197 = vpop.f32.mrb[0].mxu0
    %v198 = vadd.f32 %v113, %v197
    %v199 = vpop.f32.mrb[0].mxu0
    %v200 = vpop.f32.mrb[0].mxu0
    %v201 = vpop.f32.mrb[0].mxu0
    %202 = vdwg.mxu0
    %203 = vst [vmem:[#allocation2] sm:$0xff] %v198
    // Predicated region
    $region22: #{fc_forward.1} parent=1 // pred_check
      _
    $region23: #{fc_forward.1} parent=1 // pred_check_branch
      %205 = sbr.rel (0) target = $region25
    $region24: #{fc_forward.1} parent=1 // pred_region
      %s207 = ssub.s32 128, 128
      %208 = vsyncadd [#allocation3], %s207
      %s210 = sshll.u32 [#allocation2], 4
      %s211 = int_to_ptr.vmem [resolvable:$true] %s210
      %213 = dma.vmem_to_hbm [thread:$0]  %s211, 128, %s5, [#allocation3]
    $region25: #{fc_forward.1} parent=1 // pred_fallthru
      _
    // Predicated region
    $region26: #{fc_forward.1} parent=1 // pred_check
      _
    $region27: #{fc_forward.1} parent=1 // pred_check_branch
      %215 = sbr.rel (0) target = $region29
    $region28: #{fc_forward.1} parent=1 // pred_region
      %216 = dma.done [#allocation3], 128
    $region29: #{fc_forward.1} parent=1 // pred_fallthru
      _
    %217 = vsyncpa [#allocation3], 1

</llo_original>
